<compile_context>
chip_gen: v7x
topology: tpu7x:2x2x1
jax: 0.10.0
libtpu: 0.0.40
codegen_flags: <defaults>
</compile_context>

<pallas_src>
import functools

import jax
import jax.numpy as jnp
from jax.experimental import pallas as pl
from jax.experimental.pallas import tpu as pltpu


PAD = 128        # uniform lane padding for every hidden / output width
_ROW_TILE = 256  # batch rows per grid step for large batches (see TODO above)


# ------------------------------- fused kernel -------------------------------

def _fused_forward_kernel(
    lens_ref,                 # (Bt, 2) int32: [:,0]=acoustic len, [:,1]=text len
    ac_ref, tx_ref,           # (Bt, Ta, A) bf16 / (Bt, Tt, Dt) bf16
    sg_ref,                   # (Bt, S+G) f32  speaker|gender embeddings
    w_ref,                    # (4, PAD, PAD) f32: [W1, W2, HW1, HW2] (zero-padded)
    b_ref,                    # (4, PAD) f32:      [b1, b2, hb1, hb2] (zero-padded)
    *rest,
    feat_dim, total_head_dim,
    get_prob_dist, return_penult, save_encoded,
):
    # ---- parse optional input / outputs -------------------------------------
    idx = 0
    smax_ref = None
    if get_prob_dist:
        smax_ref = rest[idx]; idx += 1          # (PAD, PAD) segment-sum matrix
    out_ref = rest[idx]; idx += 1               # (Bt, PAD) packed logits / probs
    penult_ref = None
    if return_penult:
        penult_ref = rest[idx]; idx += 1        # (Bt, PAD)
    base_ref = rest[idx] if save_encoded else None  # (Bt, PAD)

    f32 = jnp.float32
    Bt = ac_ref.shape[0]

    alen = lens_ref[:, 0:1]                     # (Bt, 1) int32
    tlen = lens_ref[:, 1:2]

    # ---- length-masked mean pooling, vectorized over the whole batch tile ---
    def masked_mean(x_ref, L):
        T = x_ref.shape[1]
        x = x_ref[...].astype(f32)                                   # bf16 -> f32
        t_idx = jax.lax.broadcasted_iota(jnp.int32, (Bt, T, 1), 1)
        mask = (t_idx < L[:, None, :]).astype(f32)                   # (Bt, T, 1)
        s = jnp.sum(x * mask, axis=1)                                # (Bt, D)
        return s / jnp.maximum(L, 1).astype(f32)

    pooled_ac = masked_mean(ac_ref, alen)                            # (Bt, A)
    pooled_tx = masked_mean(tx_ref, tlen)                            # (Bt, Dt)

    # ---- single fused feature -> one MXU pass for fc1 -----------------------
    k_pad = w_ref.shape[1]
    pieces = [pooled_ac, pooled_tx, sg_ref[...].astype(f32)]
    if feat_dim < k_pad:
        pieces.append(jnp.zeros((Bt, k_pad - feat_dim), f32))
    feat = jnp.concatenate(pieces, axis=1)                           # (Bt, PAD)

    h1 = jnp.tanh(jnp.dot(feat, w_ref[0], preferred_element_type=f32)
                  + b_ref[0:1, :])                                   # (Bt, PAD)
    base = jnp.tanh(jnp.dot(h1, w_ref[1], preferred_element_type=f32)
                    + b_ref[1:2, :])                                 # (Bt, PAD)
    if save_encoded:
        base_ref[...] = base

    # ---- packed prediction head(s): fc1 -> relu -> fc2 [-> softmax] ---------
    hp = jnp.maximum(
        jnp.dot(base, w_ref[2], preferred_element_type=f32) + b_ref[2:3, :], 0.0)
    if return_penult:
        penult_ref[...] = hp

    logits = jnp.dot(hp, w_ref[3], preferred_element_type=f32) + b_ref[3:4, :]

    if get_prob_dist:
        # One full-slab pass: shared row max is exact per segment (shift invariance);
        # segment denominators come from a single matmul against the indicator matrix.
        lane = jax.lax.broadcasted_iota(jnp.int32, (Bt, k_pad), 1)
        valid = lane < total_head_dim
        masked = jnp.where(valid, logits, f32(-1e30))
        m = jnp.max(masked, axis=1, keepdims=True)                   # (Bt, 1)
        e = jnp.exp(masked - m)                                      # pad lanes -> 0
        denom = jnp.dot(e, smax_ref[...], preferred_element_type=f32)
        denom = denom + (1.0 - valid.astype(f32))                    # avoid 0/0 in pad lanes
        out_ref[...] = e / denom                                     # exact division
    else:
        out_ref[...] = logits


# ------------------------------ pallas wrapper -------------------------------

def _fused_forward(pack, acoustic, text_embs, sg, lens,
                   get_prob_dist, return_penult, save_encoded):
    B, Ta, A = acoustic.shape
    _, Tt, Dt = text_embs.shape
    SG = sg.shape[1]
    feat_dim = A + Dt + SG

    # Batch tiling: tiny batches stay one fully-resident tile; larger batches tile
    # along a 'parallel' grid axis so activation DMA pipelines behind compute and
    # work shards across TensorCores on v7x.
    if B <= 8:
        bt, Bp = B, B
    else:
        bt = min(_ROW_TILE, ((B + 7) // 8) * 8)
        Bp = pl.cdiv(B, bt) * bt
    if Bp != B:
        pad = Bp - B
        acoustic = jnp.pad(acoustic, ((0, pad), (0, 0), (0, 0)))
        text_embs = jnp.pad(text_embs, ((0, pad), (0, 0), (0, 0)))
        sg = jnp.pad(sg, ((0, pad), (0, 0)))
        lens = jnp.pad(lens, ((0, pad), (0, 0)))   # pad rows get length 0
    nt = Bp // bt

    def row_spec(*tail):
        n0 = len(tail)
        return pl.BlockSpec((bt,) + tail, lambda i, _n=n0: (i,) + (0,) * _n)

    def full_spec(shape):
        n0 = len(shape)
        return pl.BlockSpec(shape, lambda i, _n=n0: (0,) * _n)

    in_specs = [
        row_spec(2),                 # lengths
        row_spec(Ta, A),             # acoustic frames (bf16)
        row_spec(Tt, Dt),            # word embeddings (bf16)
        row_spec(SG),                # speaker|gender embeddings
        full_spec((4, PAD, PAD)),    # packed weights (resident across the grid)
        full_spec((4, PAD)),         # packed biases
    ]
    inputs = [lens, acoustic, text_embs, sg, pack["w"], pack["b"]]
    if get_prob_dist:
        in_specs.append(full_spec((PAD, PAD)))
        inputs.append(pack["smax"])

    out_shape = [jax.ShapeDtypeStruct((Bp, PAD), jnp.float32)]
    out_specs = [row_spec(PAD)]
    if return_penult:
        out_shape.append(jax.ShapeDtypeStruct((Bp, PAD), jnp.float32))
        out_specs.append(row_spec(PAD))
    if save_encoded:
        out_shape.append(jax.ShapeDtypeStruct((Bp, PAD), jnp.float32))
        out_specs.append(row_spec(PAD))

    kern = functools.partial(
        _fused_forward_kernel,
        feat_dim=feat_dim, total_head_dim=sum(pack["dims"]),
        get_prob_dist=get_prob_dist, return_penult=return_penult,
        save_encoded=save_encoded)

    results = pl.pallas_call(
        kern,
        grid=(nt,),
        in_specs=in_specs,
        out_specs=tuple(out_specs),
        out_shape=tuple(out_shape),
        compiler_params=pltpu.CompilerParams(dimension_semantics=("parallel",)),
    )(*inputs)

    out_slab = results[0][:B]
    ridx = 1
    penult_slab = None
    if return_penult:
        penult_slab = results[ridx][:B]; ridx += 1
    base_out = results[ridx][:B] if save_encoded else None
    return out_slab, penult_slab, base_out


# --------------------------- parameters / config -----------------------------

class Cfg:
    # base (EarlyFusion-style) dims
    audio_dim = 32
    text_dim = 32
    num_embeddings = 50          # vocab size
    num_speakers = 6
    speaker_emb_dim = 4
    num_genders = 3
    gender_emb_dim = 4
    fc_hidden_dim = 64
    output_dim = 32              # final_base_layer width (input to PredictionLayer)
    # PredictionLayer dims
    final_hidden_dim = 32
    output_task_dims = (2, 3, 4, 5, 7)   # output_0_dim .. output_4_dim


def _linear(key, fan_in, fan_out):
    kw, kb = jax.random.split(key)
    bound = 1.0 / jnp.sqrt(jnp.float32(fan_in))
    w = jax.random.uniform(kw, (fan_in, fan_out), jnp.float32, -bound, bound)
    b = jax.random.uniform(kb, (1, fan_out), jnp.float32, -bound, bound)
    return w, b


def _pack_heads(p, heads, cfg):
    """Pack the base MLP + selected PredictionLayer heads into uniform 128-lane slabs."""
    H, O, hf = cfg.fc_hidden_dim, cfg.output_dim, cfg.final_hidden_dim
    K = cfg.audio_dim + cfg.text_dim + cfg.speaker_emb_dim + cfg.gender_emb_dim
    n = len(heads)
    assert K <= PAD and H <= PAD and O <= PAD and n * hf <= PAD

    w = jnp.zeros((4, PAD, PAD), jnp.float32)
    b = jnp.zeros((4, PAD), jnp.float32)
    w = w.at[0, :K, :H].set(p["base_w1"])
    w = w.at[1, :H, :O].set(p["base_w2"])
    b = b.at[0, :H].set(p["base_b1"][0])
    b = b.at[1, :O].set(p["base_b2"][0])

    offsets, dims = [], []
    off = 0
    for i, h in enumerate(heads):
        w = w.at[2, :O, i * hf:(i + 1) * hf].set(p[f"task{h}_w1"])
        b = b.at[2, i * hf:(i + 1) * hf].set(p[f"task{h}_b1"][0])
        d = p[f"task{h}_w2"].shape[1]
        w = w.at[3, i * hf:(i + 1) * hf, off:off + d].set(p[f"task{h}_w2"])
        b = b.at[3, off:off + d].set(p[f"task{h}_b2"][0])
        offsets.append(off); dims.append(d); off += d
    assert off <= PAD

    # Per-lane segment-sum matrix for the one-pass multi-head softmax.
    smax = jnp.zeros((PAD, PAD), jnp.float32)
    for o, d in zip(offsets, dims):
        smax = smax.at[o:o + d, o:o + d].set(1.0)

    return dict(w=w, b=b, smax=smax, offsets=tuple(offsets), dims=tuple(dims),
                hf=hf, base_dim=O)


def init_params(key, cfg):
    keys = jax.random.split(key, 16)
    p = {}
    p["embedding"] = jax.random.normal(keys[0], (cfg.num_embeddings, cfg.text_dim), jnp.float32) * 0.1
    p["speaker_emb"] = jax.random.normal(keys[1], (cfg.num_speakers, cfg.speaker_emb_dim), jnp.float32) * 0.1
    p["gender_emb"] = jax.random.normal(keys[2], (cfg.num_genders, cfg.gender_emb_dim), jnp.float32) * 0.1

    fc_input_dim = cfg.audio_dim + cfg.text_dim + cfg.speaker_emb_dim + cfg.gender_emb_dim
    p["base_w1"], p["base_b1"] = _linear(keys[3], fc_input_dim, cfg.fc_hidden_dim)
    p["base_w2"], p["base_b2"] = _linear(keys[4], cfg.fc_hidden_dim, cfg.output_dim)

    for t, out_dim in enumerate(cfg.output_task_dims):
        w1h, b1h = _linear(keys[5 + 2 * t], cfg.output_dim, cfg.final_hidden_dim)
        w2h, b2h = _linear(keys[6 + 2 * t], cfg.final_hidden_dim, out_dim)
        p[f"task{t}_w1"], p[f"task{t}_b1"] = w1h, b1h
        p[f"task{t}_w2"], p[f"task{t}_b2"] = w2h, b2h

    # Pre-packed slabs (off the forward path).
    packs = {}
    for t in range(len(cfg.output_task_dims)):
        packs[(t,)] = _pack_heads(p, (t,), cfg)
    packs[(0, 1, 2, 3)] = _pack_heads(p, (0, 1, 2, 3), cfg)
    p["head_packs"] = packs
    return p


# ------------------------------- forward pass --------------------------------

def multitask_forward(params, acoustic_input, text_input, speaker_input=None,
                      length_input=None, acoustic_len_input=None, gender_input=None,
                      task_num=0, get_prob_dist=False, return_penultimate_layer=False,
                      save_encoded_data=False, multi_dataset=True):
    # Glue: embedding gathers + operand packing stay in plain JAX.
    text_embs = jnp.take(params["embedding"], text_input, axis=0).astype(jnp.bfloat16)
    acoustic = acoustic_input.astype(jnp.bfloat16)
    spk = jnp.take(params["speaker_emb"], speaker_input, axis=0)
    gen = jnp.take(params["gender_emb"], gender_input, axis=0)
    sg = jnp.concatenate([spk, gen], axis=1)                              # (B, S+G)
    lens = jnp.stack([acoustic_len_input.astype(jnp.int32).reshape(-1),
                      length_input.astype(jnp.int32).reshape(-1)], axis=1)  # (B, 2)

    if multi_dataset:
        if task_num not in (0, 1, 2, 3, 4):
            raise SystemExit(f"Task {task_num} not defined")
        heads = (task_num,)
    else:
        heads = (0, 1, 2, 3)   # task_4_out reuses task_3_predictor's result (faithful)
    pack = params["head_packs"][heads]

    out_slab, penult_slab, base_slab = _fused_forward(
        pack, acoustic, text_embs, sg, lens,
        get_prob_dist, return_penultimate_layer, save_encoded_data)

    hf = pack["hf"]
    head_outs = []
    for i, (off, d) in enumerate(zip(pack["offsets"], pack["dims"])):
        logits_i = out_slab[:, off:off + d]
        if return_penultimate_layer:
            head_outs.append((logits_i, penult_slab[:, i * hf:(i + 1) * hf]))
        else:
            head_outs.append(logits_i)

    outs = [None, None, None, None, None]
    if multi_dataset:
        outs[task_num] = head_outs[0]
    else:
        outs[0], outs[1], outs[2], outs[3] = head_outs
        outs[4] = head_outs[3]   # task_4_out = task_3_predictor(...) — reused, not recomputed

    if save_encoded_data:
        return tuple(outs) + (base_slab[:, :pack["base_dim"]],)
    return tuple(outs)


# ----------------------------------- main ------------------------------------

if __name__ == "__main__":
    cfg = Cfg()
    key = jax.random.PRNGKey(0)
    k_par, k_ac, k_tx, k_spk, k_gen = jax.random.split(key, 5)

    params = init_params(k_par, cfg)

    B, T_a, T_t = 2, 12, 8
    acoustic_input = jax.random.normal(k_ac, (B, T_a, cfg.audio_dim), jnp.float32)
    text_input = jax.random.randint(k_tx, (B, T_t), 0, cfg.num_embeddings, jnp.int32)
    speaker_input = jax.random.randint(k_spk, (B,), 0, cfg.num_speakers, jnp.int32)
    gender_input = jax.random.randint(k_gen, (B,), 0, cfg.num_genders, jnp.int32)
    length_input = jnp.array([T_t, T_t - 3], jnp.int32)
    acoustic_len_input = jnp.array([T_a, T_a - 5], jnp.int32)

    # 1) multi-dataset path: a single task head, fused end-to-end in one pallas_call.
    outs = multitask_forward(
        params, acoustic_input, text_input,
        speaker_input=speaker_input, length_input=length_input,
        acoustic_len_input=acoustic_len_input, gender_input=gender_input,
        task_num=0, get_prob_dist=False, return_penultimate_layer=False,
        multi_dataset=True)
    task0 = jax.block_until_ready(outs[0])
    assert task0.shape == (B, cfg.output_task_dims[0])
    assert all(o is None for o in outs[1:])

    # 2) all-heads path with probability outputs (task_4 reuses the task_3 head result).
    outs_all = multitask_forward(
        params, acoustic_input, text_input,
        speaker_input=speaker_input, length_input=length_input,
        acoustic_len_input=acoustic_len_input, gender_input=gender_input,
        task_num=0, get_prob_dist=True, return_penultimate_layer=False,
        multi_dataset=False)
    jax.block_until_ready(outs_all[4])
    assert outs_all[3].shape == (B, cfg.output_task_dims[3])
    assert outs_all[4].shape == (B, cfg.output_task_dims[3])
    row_sums = jnp.sum(outs_all[0], axis=1)
    assert bool(jnp.all(jnp.abs(row_sums - 1.0) < 1e-3))

    # 3) penultimate + encoded-base outputs (conditionally emitted by the kernel).
    outs_pen = multitask_forward(
        params, acoustic_input, text_input,
        speaker_input=speaker_input, length_input=length_input,
        acoustic_len_input=acoustic_len_input, gender_input=gender_input,
        task_num=2, get_prob_dist=False, return_penultimate_layer=True,
        save_encoded_data=True, multi_dataset=True)
    logits2, penult2 = outs_pen[2]
    base_enc = outs_pen[5]
    jax.block_until_ready(base_enc)
    assert logits2.shape == (B, cfg.output_task_dims[2])
    assert penult2.shape == (B, cfg.final_hidden_dim)
    assert base_enc.shape == (B, cfg.output_dim)

    print("KERNEL_OK")
</pallas_src>

<mosaic_0001>
module attributes {stable_mosaic.version = 11 : i64} {
  func.func @_fused_forward_kernel(%arg0: i32, %arg1: memref<2x2xi32, #tpu.memory_space<vmem>>, %arg2: memref<2x12x32xbf16, #tpu.memory_space<vmem>>, %arg3: memref<2x8x32xbf16, #tpu.memory_space<vmem>>, %arg4: memref<2x8xf32, #tpu.memory_space<vmem>>, %arg5: memref<4x128x128xf32, #tpu.memory_space<vmem>>, %arg6: memref<4x128xf32, #tpu.memory_space<vmem>>, %arg7: memref<2x128xf32, #tpu.memory_space<vmem>>) attributes {dimension_semantics = [#tpu.dimension_semantics<parallel>], iteration_bounds = array<i64: 1>, scalar_prefetch = 0 : i64, scratch_operands = 0 : i64, tpu.core_type = #tpu.core_type<tc>, window_params = [{transform_indices = @transform_0, window_bounds = array<i64: 2, 2>}, {transform_indices = @transform_1, window_bounds = array<i64: 2, 12, 32>}, {transform_indices = @transform_2, window_bounds = array<i64: 2, 8, 32>}, {transform_indices = @transform_3, window_bounds = array<i64: 2, 8>}, {pipeline_mode = #tpu.pipeline_mode<synchronous>, transform_indices = @transform_4, window_bounds = array<i64: 4, 128, 128>}, {pipeline_mode = #tpu.pipeline_mode<synchronous>, transform_indices = @transform_5, window_bounds = array<i64: 4, 128>}, {transform_indices = @transform_6, window_bounds = array<i64: 2, 128>}]} {
    %c0 = arith.constant 0 : index
    %c0_0 = arith.constant 0 : index
    %0 = vector.load %arg1[%c0, %c0_0] : memref<2x2xi32, #tpu.memory_space<vmem>>, vector<2x1xi32>
    %c0_1 = arith.constant 0 : index
    %c1 = arith.constant 1 : index
    %1 = vector.load %arg1[%c0_1, %c1] : memref<2x2xi32, #tpu.memory_space<vmem>>, vector<2x1xi32>
    %c0_2 = arith.constant 0 : index
    %c0_3 = arith.constant 0 : index
    %c0_4 = arith.constant 0 : index
    %2 = vector.load %arg2[%c0_2, %c0_3, %c0_4] : memref<2x12x32xbf16, #tpu.memory_space<vmem>>, vector<2x12x32xbf16>
    %3 = arith.extf %2 : vector<2x12x32xbf16> to vector<2x12x32xf32>
    %4 = tpu.iota {dimensions = array<i32: 1>} : vector<2x12x1xi32>
    %5 = vector.shape_cast %0 : vector<2x1xi32> to vector<2x1x1xi32>
    %6 = vector.broadcast %5 : vector<2x1x1xi32> to vector<2x12x1xi32>
    %7 = arith.cmpi slt, %4, %6 : vector<2x12x1xi32>
    %8 = arith.extui %7 : vector<2x12x1xi1> to vector<2x12x1xi32>
    %9 = arith.sitofp %8 : vector<2x12x1xi32> to vector<2x12x1xf32>
    %10 = vector.broadcast %9 : vector<2x12x1xf32> to vector<2x12x32xf32>
    %11 = arith.mulf %3, %10 : vector<2x12x32xf32>
    %cst = arith.constant dense<0.000000e+00> : vector<2x32xf32>
    %12 = vector.multi_reduction <add>, %11, %cst [1] : vector<2x12x32xf32> to vector<2x32xf32>
    %c1_i32 = arith.constant 1 : i32
    %13 = vector.broadcast %c1_i32 : i32 to vector<2x1xi32>
    %14 = arith.maxsi %0, %13 : vector<2x1xi32>
    %15 = arith.sitofp %14 : vector<2x1xi32> to vector<2x1xf32>
    %16 = vector.broadcast %15 : vector<2x1xf32> to vector<2x32xf32>
    %17 = arith.divf %12, %16 : vector<2x32xf32>
    %c0_5 = arith.constant 0 : index
    %c0_6 = arith.constant 0 : index
    %c0_7 = arith.constant 0 : index
    %18 = vector.load %arg3[%c0_5, %c0_6, %c0_7] : memref<2x8x32xbf16, #tpu.memory_space<vmem>>, vector<2x8x32xbf16>
    %19 = arith.extf %18 : vector<2x8x32xbf16> to vector<2x8x32xf32>
    %20 = tpu.iota {dimensions = array<i32: 1>} : vector<2x8x1xi32>
    %21 = vector.shape_cast %1 : vector<2x1xi32> to vector<2x1x1xi32>
    %22 = vector.broadcast %21 : vector<2x1x1xi32> to vector<2x8x1xi32>
    %23 = arith.cmpi slt, %20, %22 : vector<2x8x1xi32>
    %24 = arith.extui %23 : vector<2x8x1xi1> to vector<2x8x1xi32>
    %25 = arith.sitofp %24 : vector<2x8x1xi32> to vector<2x8x1xf32>
    %26 = vector.broadcast %25 : vector<2x8x1xf32> to vector<2x8x32xf32>
    %27 = arith.mulf %19, %26 : vector<2x8x32xf32>
    %cst_8 = arith.constant dense<0.000000e+00> : vector<2x32xf32>
    %28 = vector.multi_reduction <add>, %27, %cst_8 [1] : vector<2x8x32xf32> to vector<2x32xf32>
    %c1_i32_9 = arith.constant 1 : i32
    %29 = vector.broadcast %c1_i32_9 : i32 to vector<2x1xi32>
    %30 = arith.maxsi %1, %29 : vector<2x1xi32>
    %31 = arith.sitofp %30 : vector<2x1xi32> to vector<2x1xf32>
    %32 = vector.broadcast %31 : vector<2x1xf32> to vector<2x32xf32>
    %33 = arith.divf %28, %32 : vector<2x32xf32>
    %c0_10 = arith.constant 0 : index
    %c0_11 = arith.constant 0 : index
    %34 = vector.load %arg4[%c0_10, %c0_11] : memref<2x8xf32, #tpu.memory_space<vmem>>, vector<2x8xf32>
    %cst_12 = arith.constant 0.000000e+00 : f32
    %35 = vector.broadcast %cst_12 : f32 to vector<2x56xf32>
    %36 = tpu.concatenate %17, %33, %34, %35 in 1 : vector<2x32xf32>, vector<2x32xf32>, vector<2x8xf32>, vector<2x56xf32> -> vector<2x128xf32>
    %c0_13 = arith.constant 0 : index
    %c0_14 = arith.constant 0 : index
    %c0_15 = arith.constant 0 : index
    %37 = vector.load %arg5[%c0_13, %c0_14, %c0_15] : memref<4x128x128xf32, #tpu.memory_space<vmem>>, vector<1x128x128xf32>
    %38 = vector.shape_cast %37 : vector<1x128x128xf32> to vector<128x128xf32>
    %cst_16 = arith.constant dense<0.000000e+00> : vector<2x128xf32>
    %39 = tpu.matmul %36, %38, %cst_16 {dimension_numbers = #tpu.dot_dimension_numbers<[1], [0], [0], [1], [0, 0, 1, 1], [], []>} : vector<2x128xf32>, vector<128x128xf32>, vector<2x128xf32> -> vector<2x128xf32>
    %c0_17 = arith.constant 0 : index
    %c0_18 = arith.constant 0 : index
    %40 = vector.load %arg6[%c0_17, %c0_18] : memref<4x128xf32, #tpu.memory_space<vmem>>, vector<1x128xf32>
    %41 = vector.broadcast %40 : vector<1x128xf32> to vector<2x128xf32>
    %42 = arith.addf %39, %41 : vector<2x128xf32>
    %43 = math.tanh %42 : vector<2x128xf32>
    %c1_19 = arith.constant 1 : index
    %c0_20 = arith.constant 0 : index
    %c0_21 = arith.constant 0 : index
    %44 = vector.load %arg5[%c1_19, %c0_20, %c0_21] : memref<4x128x128xf32, #tpu.memory_space<vmem>>, vector<1x128x128xf32>
    %45 = vector.shape_cast %44 : vector<1x128x128xf32> to vector<128x128xf32>
    %cst_22 = arith.constant dense<0.000000e+00> : vector<2x128xf32>
    %46 = tpu.matmul %43, %45, %cst_22 {dimension_numbers = #tpu.dot_dimension_numbers<[1], [0], [0], [1], [0, 0, 1, 1], [], []>} : vector<2x128xf32>, vector<128x128xf32>, vector<2x128xf32> -> vector<2x128xf32>
    %c1_23 = arith.constant 1 : index
    %c0_24 = arith.constant 0 : index
    %47 = vector.load %arg6[%c1_23, %c0_24] : memref<4x128xf32, #tpu.memory_space<vmem>>, vector<1x128xf32>
    %48 = vector.broadcast %47 : vector<1x128xf32> to vector<2x128xf32>
    %49 = arith.addf %46, %48 : vector<2x128xf32>
    %50 = math.tanh %49 : vector<2x128xf32>
    %c2 = arith.constant 2 : index
    %c0_25 = arith.constant 0 : index
    %c0_26 = arith.constant 0 : index
    %51 = vector.load %arg5[%c2, %c0_25, %c0_26] : memref<4x128x128xf32, #tpu.memory_space<vmem>>, vector<1x128x128xf32>
    %52 = vector.shape_cast %51 : vector<1x128x128xf32> to vector<128x128xf32>
    %cst_27 = arith.constant dense<0.000000e+00> : vector<2x128xf32>
    %53 = tpu.matmul %50, %52, %cst_27 {dimension_numbers = #tpu.dot_dimension_numbers<[1], [0], [0], [1], [0, 0, 1, 1], [], []>} : vector<2x128xf32>, vector<128x128xf32>, vector<2x128xf32> -> vector<2x128xf32>
    %c2_28 = arith.constant 2 : index
    %c0_29 = arith.constant 0 : index
    %54 = vector.load %arg6[%c2_28, %c0_29] : memref<4x128xf32, #tpu.memory_space<vmem>>, vector<1x128xf32>
    %55 = vector.broadcast %54 : vector<1x128xf32> to vector<2x128xf32>
    %56 = arith.addf %53, %55 : vector<2x128xf32>
    %cst_30 = arith.constant 0.000000e+00 : f32
    %57 = vector.broadcast %cst_30 : f32 to vector<2x128xf32>
    %58 = arith.maximumf %56, %57 : vector<2x128xf32>
    %c3 = arith.constant 3 : index
    %c0_31 = arith.constant 0 : index
    %c0_32 = arith.constant 0 : index
    %59 = vector.load %arg5[%c3, %c0_31, %c0_32] : memref<4x128x128xf32, #tpu.memory_space<vmem>>, vector<1x128x128xf32>
    %60 = vector.shape_cast %59 : vector<1x128x128xf32> to vector<128x128xf32>
    %cst_33 = arith.constant dense<0.000000e+00> : vector<2x128xf32>
    %61 = tpu.matmul %58, %60, %cst_33 {dimension_numbers = #tpu.dot_dimension_numbers<[1], [0], [0], [1], [0, 0, 1, 1], [], []>} : vector<2x128xf32>, vector<128x128xf32>, vector<2x128xf32> -> vector<2x128xf32>
    %c3_34 = arith.constant 3 : index
    %c0_35 = arith.constant 0 : index
    %62 = vector.load %arg6[%c3_34, %c0_35] : memref<4x128xf32, #tpu.memory_space<vmem>>, vector<1x128xf32>
    %63 = vector.broadcast %62 : vector<1x128xf32> to vector<2x128xf32>
    %64 = arith.addf %61, %63 : vector<2x128xf32>
    %c0_36 = arith.constant 0 : index
    %c0_37 = arith.constant 0 : index
    %65 = vector.load %arg7[%c0_36, %c0_37] : memref<2x128xf32, #tpu.memory_space<vmem>>, vector<2x128xf32>
    tpu.vector_store %arg7[%c0_36, %c0_37], %64 {strides = array<i32>} : memref<2x128xf32, #tpu.memory_space<vmem>>, vector<2x128xf32>,
    return
  }
  func.func @transform_0(%arg0: i32) -> (i32, i32) {
    %c0_i32 = arith.constant 0 : i32
    %c0_i32_0 = arith.constant 0 : i32
    return %arg0, %c0_i32 : i32, i32
  }
  func.func @transform_1(%arg0: i32) -> (i32, i32, i32) {
    %c0_i32 = arith.constant 0 : i32
    %c0_i32_0 = arith.constant 0 : i32
    %c0_i32_1 = arith.constant 0 : i32
    return %arg0, %c0_i32, %c0_i32_0 : i32, i32, i32
  }
  func.func @transform_2(%arg0: i32) -> (i32, i32, i32) {
    %c0_i32 = arith.constant 0 : i32
    %c0_i32_0 = arith.constant 0 : i32
    %c0_i32_1 = arith.constant 0 : i32
    return %arg0, %c0_i32, %c0_i32_0 : i32, i32, i32
  }
  func.func @transform_3(%arg0: i32) -> (i32, i32) {
    %c0_i32 = arith.constant 0 : i32
    %c0_i32_0 = arith.constant 0 : i32
    return %arg0, %c0_i32 : i32, i32
  }
  func.func @transform_4(%arg0: i32) -> (i32, i32, i32) {
    %c0_i32 = arith.constant 0 : i32
    %c0_i32_0 = arith.constant 0 : i32
    %c0_i32_1 = arith.constant 0 : i32
    %c0_i32_2 = arith.constant 0 : i32
    return %c0_i32, %c0_i32_0, %c0_i32_1 : i32, i32, i32
  }
  func.func @transform_5(%arg0: i32) -> (i32, i32) {
    %c0_i32 = arith.constant 0 : i32
    %c0_i32_0 = arith.constant 0 : i32
    %c0_i32_1 = arith.constant 0 : i32
    return %c0_i32, %c0_i32_0 : i32, i32
  }
  func.func @transform_6(%arg0: i32) -> (i32, i32) {
    %c0_i32 = arith.constant 0 : i32
    %c0_i32_0 = arith.constant 0 : i32
    return %arg0, %c0_i32 : i32, i32
  }
}

</mosaic_0001>

<llo_original>
// kernel: tpu_custom_call.1
$region0: #{tpu_custom_call.1}
  #allocation0 [shape = 'u32[]', space=smem, size = 0x4, offset = 0x4, fixed_abs, tag = 'smem constant byte address 0x4 - core index']
  #allocation1 [shape = 'u32[144,128]{1,0:T(1,128)}', space=vmem, size = 0x12000, scoped, tag = 'internal scratch']
  %s0 = inlined_call_operand.vmem [shape: s32[2,2], index: 0, kind: input, shape index: {}]
  %s1 = inlined_call_operand.vmem [shape: bf16[2,12,32], index: 1, kind: input, shape index: {}]
  %s2 = inlined_call_operand.vmem [shape: bf16[2,8,32], index: 2, kind: input, shape index: {}]
  %s3 = inlined_call_operand.vmem [shape: f32[2,8], index: 3, kind: input, shape index: {}]
  %s4 = inlined_call_operand.hbm [shape: f32[4,128,128], index: 4, kind: input, shape index: {}]
  %s5 = inlined_call_operand.vmem [shape: f32[4,128], index: 5, kind: input, shape index: {}]
  %s6 = inlined_call_operand.hbm [shape: f32[2,128], index: 6, kind: output, shape index: {}]
  %s7 = sld [smem:[#allocation0]]
  $region38: #{tpu_custom_call.1} parent=0
    _
  %s9 = ssub.s32 1, %s7
  %s10 = scalar_select 0, %s9, %s7
  $region1: #{tpu_custom_call.1} parent=0
    #allocation2 [shape = 'u8[262144]{0}', space=vmem, size = 0x40000, scoped, tag = 'input window, operand 4, single buffered']
    #allocation3 [shape = 's32[1]{0}', space=sflag, size = 0x4, scoped, tag = 'scoped memory for tpu_custom_call.1']
    #allocation4 [shape = 's32[1]{0}', space=sflag, size = 0x4, scoped, tag = 'scoped memory for tpu_custom_call.1']
    #allocation5 [shape = 'u8[1024]{0}', space=vmem, size = 0x400, scoped, tag = 'output window, operand 0, single buffered']
    %11 = vsyncpa [#allocation3], 0
    %12 = vsyncpa [#allocation4], 0
    // Predicated region
    $region2: #{tpu_custom_call.1} parent=1 // pred_check
      _
    $region3: #{tpu_custom_call.1} parent=1 // pred_check_branch
      %14 = sbr.rel (0) target = $region5
    $region4: #{tpu_custom_call.1} parent=1 // pred_region
      _
    $region5: #{tpu_custom_call.1} parent=1 // pred_fallthru
      _
    // Predicated region
    $region6: #{tpu_custom_call.1} parent=1 // pred_check
      _
    $region7: #{tpu_custom_call.1} parent=1 // pred_check_branch
      %16 = sbr.rel (0) target = $region9
    $region8: #{tpu_custom_call.1} parent=1 // pred_region
      _
    $region9: #{tpu_custom_call.1} parent=1 // pred_fallthru
      _
    // Predicated region
    $region10: #{tpu_custom_call.1} parent=1 // pred_check
      _
    $region11: #{tpu_custom_call.1} parent=1 // pred_check_branch
      %18 = sbr.rel (0) target = $region13
    $region12: #{tpu_custom_call.1} parent=1 // pred_region
      _
    $region13: #{tpu_custom_call.1} parent=1 // pred_fallthru
      _
    // Predicated region
    $region14: #{tpu_custom_call.1} parent=1 // pred_check
      _
    $region15: #{tpu_custom_call.1} parent=1 // pred_check_branch
      %20 = sbr.rel (0) target = $region17
    $region16: #{tpu_custom_call.1} parent=1 // pred_region
      _
    $region17: #{tpu_custom_call.1} parent=1 // pred_fallthru
      _
    // Predicated region
    $region18: #{tpu_custom_call.1} parent=1 // pred_check
      _
    $region19: #{tpu_custom_call.1} parent=1 // pred_check_branch
      %22 = sbr.rel (0) target = $region21
    $region20: #{tpu_custom_call.1} parent=1 // pred_region
      %s24 = ssub.s32 8192, 8192
      %25 = vsyncadd [#allocation3], %s24
      %s26 = sshll.u32 [#allocation2], 4
      %s27 = int_to_ptr.vmem [resolvable:$true] %s26
      %32 = dma.hbm_to_vmem [thread:$0]  %s4, 8192, %s27, [#allocation3], 128, 128, 8
    $region21: #{tpu_custom_call.1} parent=1 // pred_fallthru
      _
    // Predicated region
    $region22: #{tpu_custom_call.1} parent=1 // pred_check
      _
    $region23: #{tpu_custom_call.1} parent=1 // pred_check_branch
      %34 = sbr.rel (0) target = $region25
    $region24: #{tpu_custom_call.1} parent=1 // pred_region
      _
    $region25: #{tpu_custom_call.1} parent=1 // pred_fallthru
      _
    // Predicated region
    $region26: #{tpu_custom_call.1} parent=1 // pred_check
      _
    $region27: #{tpu_custom_call.1} parent=1 // pred_check_branch
      %36 = sbr.rel (0) target = $region29
    $region28: #{tpu_custom_call.1} parent=1 // pred_region
      %37 = dma.done [#allocation3], 8192
    $region29: #{tpu_custom_call.1} parent=1 // pred_fallthru
      _
    %v38 = vld [vmem:[%s0] sm:$0x3]
    %v39 = vld [vmem:[%s1] sm:$0xf]
    %v40 = vld [vmem:[%s1 + $0x4] sm:$0x3]
    %v41 = vld [vmem:[%s1 + $0x8] sm:$0xf]
    %v42 = vld [vmem:[%s1 + $0xc] sm:$0x3]
    %v43 = vunpack.c.l.bf16 %v39
    %v44 = vunpack.c.l.bf16 %v40
    %v45 = vunpack.c.l.bf16 %v41
    %v46 = vunpack.c.l.bf16 %v42
    %v47 = vlaneseq
    %v48 = vshrl.u32 %v47, 7
    %v49 = vadd.s32 %v48, 8
    %v51 = vunpack.c.l.s4 1966171168
    %v52 = vunpack.c.0.s8 %v51
    %v53 = vlaneseq
    %v54 = vshrl.u32 %v53, 7
    %v55 = vsub.s32 %v52, %v54
    %v56 = vrot.slane %v38, %v55
    %v57 = vcombine.high %v56, %v56
    %v59 = vunpack.c.l.s4 1966171168
    %v60 = vunpack.c.0.s8 %v59
    %v61 = vlaneseq
    %v62 = vshrl.u32 %v61, 7
    %v63 = vsub.s32 %v60, %v62
    %v64 = vrot.slane %v56, %v63
    %v66 = vunpack.c.l.s4 1966171168
    %v67 = vunpack.c.0.s8 %v66
    %v68 = vlaneseq
    %v69 = vshrl.u32 %v68, 7
    %v70 = vsub.s32 %v67, %v69
    %v71 = vrot.slane %v57, %v70
    %v72 = vlaneseq
    %v73 = vshrl.u32 %v72, 7
    %v74 = vsub.s32 0, %v73
    %v75 = vrot.slane %v64, %v74
    %v76 = vlaneseq
    %v77 = vshrl.u32 %v76, 7
    %v78 = vsub.s32 0, %v77
    %v79 = vrot.slane %v71, %v78
    %vm80 = vcmp.lt.s32.totalorder %v48, %v75
    %vm81 = vcmp.lt.s32.totalorder %v49, %v75
    %vm82 = vcmp.lt.s32.totalorder %v48, %v79
    %vm83 = vcmp.lt.s32.totalorder %v49, %v79
    %v84 = vsel %vm80, 1, 0
    %v85 = vsel %vm81, 1, 0
    %v86 = vsel %vm82, 1, 0
    %v87 = vsel %vm83, 1, 0
    %v88 = vcvt.s32.f32 %v84
    %v89 = vcvt.s32.f32 %v85
    %v90 = vcvt.s32.f32 %v86
    %v91 = vcvt.s32.f32 %v87
    %93 = vset.pattern.permute.xlu0 0
    %94 = vperm.xlu0 %93, %v88
    %v95 = vpop.permute.xlu0 %94
    %98 = vset.pattern.permute.xlu0 0
    %99 = vperm.xlu0 %98, %v89
    %v100 = vpop.permute.xlu0 %99
    %103 = vset.pattern.permute.xlu0 0
    %104 = vperm.xlu0 %103, %v90
    %v105 = vpop.permute.xlu0 %104
    %108 = vset.pattern.permute.xlu0 0
    %109 = vperm.xlu0 %108, %v91
    %v110 = vpop.permute.xlu0 %109
    %v112 = vmul.f32 %v43, %v95
    %v113 = vmul.f32 %v44, %v100
    %v114 = vmul.f32 %v45, %v105
    %v115 = vmul.f32 %v46, %v110
    %vm116 = vcmask 261120
    %v117 = vsel %vm116, %v112, 0.0
    %vm118 = vcmask 257024
    %v119 = vsel %vm118, %v113, 0.0
    %v120 = vadd.f32 %v117, %v119
    %v121 = vrot.slane %v120, 4
    %v122 = vadd.f32 %v120, %v121
    %v123 = vrot.slane %v122, 2
    %v124 = vadd.f32 %v122, %v123
    %v125 = vrot.slane %v124, 1
    %v126 = vadd.f32 %v124, %v125
    %v127 = vsel %vm116, %v114, 0.0
    %v128 = vsel %vm118, %v115, 0.0
    %v129 = vadd.f32 %v127, %v128
    %v130 = vrot.slane %v129, 4
    %v131 = vadd.f32 %v129, %v130
    %v132 = vrot.slane %v131, 2
    %v133 = vadd.f32 %v131, %v132
    %v134 = vrot.slane %v133, 1
    %v135 = vadd.f32 %v133, %v134
    %vm136 = vcmp.gt.s32.totalorder %v38, 1
    %v137 = vsel %vm136, %v38, 1
    %v138 = vcvt.s32.f32 %v137
    %140 = vset.pattern.permute.xlu0 0
    %141 = vperm.xlu0 %140, %v138
    %v142 = vpop.permute.xlu0 %141
    %v143 = vrot.slane %v142, 1
    %v146 = vrcp.pop %v142
    %v147 = vmul.f32 %v126, %v146
    %v148 = vrcp.pop %v143
    %v149 = vmul.f32 %v135, %v148
    %v150 = vld [vmem:[%s2] sm:$0xf]
    %v151 = vld [vmem:[%s2 + $0x4] sm:$0xf]
    %v152 = vunpack.c.l.bf16 %v150
    %v153 = vunpack.c.l.bf16 %v151
    %154 = vset.pattern.permute.xlu0 1
    %155 = vperm.xlu0 %154, %v88
    %v156 = vpop.permute.xlu0 %155
    %158 = vset.pattern.permute.xlu0 1
    %159 = vperm.xlu0 %158, %v90
    %v160 = vpop.permute.xlu0 %159
    %v162 = vmul.f32 %v152, %v156
    %v163 = vmul.f32 %v153, %v160
    %v164 = vsel %vm116, %v162, 0.0
    %v165 = vrot.slane %v164, 4
    %v166 = vadd.f32 %v164, %v165
    %v167 = vrot.slane %v166, 2
    %v168 = vadd.f32 %v166, %v167
    %v169 = vrot.slane %v168, 1
    %v170 = vadd.f32 %v168, %v169
    %v171 = vsel %vm116, %v163, 0.0
    %v172 = vrot.slane %v171, 4
    %v173 = vadd.f32 %v171, %v172
    %v174 = vrot.slane %v173, 2
    %v175 = vadd.f32 %v173, %v174
    %v176 = vrot.slane %v175, 1
    %v177 = vadd.f32 %v175, %v176
    %178 = vset.pattern.permute.xlu0 1
    %179 = vperm.xlu0 %178, %v138
    %v180 = vpop.permute.xlu0 %179
    %v181 = vrot.slane %v180, 1
    %v184 = vrcp.pop %v180
    %v185 = vmul.f32 %v170, %v184
    %v186 = vrcp.pop %v181
    %v187 = vmul.f32 %v177, %v186
    %v188 = vld [vmem:[%s3] sm:$0x3]
    %v191 = vrot.slane %v149, 7
    %vm192 = vcmask 1041409
    %v193 = vsel %vm192, %v191, %v147
    %v197 = vrot.slane %v187, 7
    %v198 = vsel %vm192, %v197, %v185
    %199 = vrot.lane.b32.xlu0 %v198, 32
    %v200 = vpop.permute.xlu0 %199
    %203 = vrot.lane.b32.xlu0 %v188, 64
    %v204 = vpop.permute.xlu0 %203
    %v206 = vsel %vm116, %v193, %v200
    %vm207 = vcmask 523264
    %v208 = vsel %vm207, %v206, %v204
    %vm209 = vcmask 588800
    %v210 = vsel %vm209, %v208, 0.0
    %v211 = vld [vmem:[#allocation2] sm:$0xff]
    %v212 = vld [vmem:[#allocation2 + $0x8] sm:$0xff]
    %v213 = vld [vmem:[#allocation2 + $0x10] sm:$0xff]
    %v214 = vld [vmem:[#allocation2 + $0x18] sm:$0xff]
    %v215 = vld [vmem:[#allocation2 + $0x20] sm:$0xff]
    %v216 = vld [vmem:[#allocation2 + $0x28] sm:$0xff]
    %v217 = vld [vmem:[#allocation2 + $0x30] sm:$0xff]
    %v218 = vld [vmem:[#allocation2 + $0x38] sm:$0xff]
    %v219 = vld [vmem:[#allocation2 + $0x40] sm:$0xff]
    %v220 = vld [vmem:[#allocation2 + $0x48] sm:$0xff]
    %v221 = vld [vmem:[#allocation2 + $0x50] sm:$0xff]
    %v222 = vld [vmem:[#allocation2 + $0x58] sm:$0xff]
    %v223 = vld [vmem:[#allocation2 + $0x60] sm:$0xff]
    %v224 = vld [vmem:[#allocation2 + $0x68] sm:$0xff]
    %v225 = vld [vmem:[#allocation2 + $0x70] sm:$0xff]
    %v226 = vld [vmem:[#allocation2 + $0x78] sm:$0xff]
    %v227 = vld [vmem:[%s5] sm:$0x1]
    %v228 = vlaneseq
    %v229 = vshrl.u32 %v228, 7
    %v230 = vsub.s32 0, %v229
    %v231 = vrot.slane %v227, %v230
    %232 = vmatprep.subr.mxu0 0.0
    %233 = vmatpush1.msra.mxu0 %v211
    %234 = vmatprep.subr.mxu0 0.0
    %235 = vmatpush1.msra.mxu0 %v212
    %236 = vmatprep.subr.mxu0 0.0
    %237 = vmatpush1.msra.mxu0 %v213
    %238 = vmatprep.subr.mxu0 0.0
    %239 = vmatpush1.msra.mxu0 %v214
    %240 = vmatprep.subr.mxu0 0.0
    %241 = vmatpush1.msra.mxu0 %v215
    %242 = vmatprep.subr.mxu0 0.0
    %243 = vmatpush1.msra.mxu0 %v216
    %244 = vmatprep.subr.mxu0 0.0
    %245 = vmatpush1.msra.mxu0 %v217
    %246 = vmatprep.subr.mxu0 0.0
    %247 = vmatpush1.msra.mxu0 %v218
    %248 = vmatprep.subr.mxu0 0.0
    %249 = vmatpush1.msra.mxu0 %v219
    %250 = vmatprep.subr.mxu0 0.0
    %251 = vmatpush1.msra.mxu0 %v220
    %252 = vmatprep.subr.mxu0 0.0
    %253 = vmatpush1.msra.mxu0 %v221
    %254 = vmatprep.subr.mxu0 0.0
    %255 = vmatpush1.msra.mxu0 %v222
    %256 = vmatprep.subr.mxu0 0.0
    %257 = vmatpush1.msra.mxu0 %v223
    %258 = vmatprep.subr.mxu0 0.0
    %259 = vmatpush1.msra.mxu0 %v224
    %260 = vmatprep.subr.mxu0 0.0
    %261 = vmatpush1.msra.mxu0 %v225
    %262 = vmatprep.subr.mxu0 0.0
    %263 = vmatpush1.msra.mxu0 %v226
    %264 = vmatprep.subr.mxu0 0.0
    %265 = vmatpush1.msra.mxu0 0.0
    %266 = vmatprep.subr.mxu0 0.0
    %267 = vmatpush1.msra.mxu0 0.0
    %268 = vmatprep.subr.mxu0 0.0
    %269 = vmatpush1.msra.mxu0 0.0
    %270 = vmatprep.subr.mxu0 0.0
    %271 = vmatpush1.msra.mxu0 0.0
    %272 = vmatprep.subr.mxu0 0.0
    %273 = vmatpush1.msra.mxu0 0.0
    %274 = vmatprep.subr.mxu0 0.0
    %275 = vmatpush1.msra.mxu0 0.0
    %276 = vmatprep.subr.mxu0 0.0
    %277 = vmatpush1.msra.mxu0 0.0
    %278 = vmatprep.subr.mxu0 0.0
    %279 = vmatpush1.msra.mxu0 0.0
    %280 = vmatprep.subr.mxu0 0.0
    %281 = vmatpush1.msra.mxu0 0.0
    %282 = vmatprep.subr.mxu0 0.0
    %283 = vmatpush1.msra.mxu0 0.0
    %284 = vmatprep.subr.mxu0 0.0
    %285 = vmatpush1.msra.mxu0 0.0
    %286 = vmatprep.subr.mxu0 0.0
    %287 = vmatpush1.msra.mxu0 0.0
    %288 = vmatprep.subr.mxu0 0.0
    %289 = vmatpush1.msra.mxu0 0.0
    %290 = vmatprep.subr.mxu0 0.0
    %291 = vmatpush1.msra.mxu0 0.0
    %292 = vmatprep.subr.mxu0 0.0
    %293 = vmatpush1.msra.mxu0 0.0
    %294 = vmatprep.subr.mxu0 0.0
    %295 = vmatpush1.msra.mxu0 0.0
    %296 = vmatprep.mubr.f32.mxu0 0.0
    %297 = vmatmul.mubr.f32.gmra.mrb[0].mxu0 %v210
    %v298 = vpop.f32.mrb[0].mxu0
    %v299 = vadd.f32 %v231, %v298
    %v300 = vpop.f32.mrb[0].mxu0
    %301 = vdwg.mxu0
    %v302 = vtanh.pop %v299
    %s303 = scalar_lea.vmem [#allocation2], 128
    %v304 = vld [vmem:[%s303] sm:$0xff]
    %v305 = vld [vmem:[%s303 + $0x8] sm:$0xff]
    %v306 = vld [vmem:[%s303 + $0x10] sm:$0xff]
    %v307 = vld [vmem:[%s303 + $0x18] sm:$0xff]
    %v308 = vld [vmem:[%s303 + $0x20] sm:$0xff]
    %v309 = vld [vmem:[%s303 + $0x28] sm:$0xff]
    %v310 = vld [vmem:[%s303 + $0x30] sm:$0xff]
    %v311 = vld [vmem:[%s303 + $0x38] sm:$0xff]
    %v312 = vld [vmem:[%s303 + $0x40] sm:$0xff]
    %v313 = vld [vmem:[%s303 + $0x48] sm:$0xff]
    %v314 = vld [vmem:[%s303 + $0x50] sm:$0xff]
    %v315 = vld [vmem:[%s303 + $0x58] sm:$0xff]
    %v316 = vld [vmem:[%s303 + $0x60] sm:$0xff]
    %v317 = vld [vmem:[%s303 + $0x68] sm:$0xff]
    %v318 = vld [vmem:[%s303 + $0x70] sm:$0xff]
    %v319 = vld [vmem:[%s303 + $0x78] sm:$0xff]
    %v320 = vld [vmem:[%s5 + $0x1] sm:$0x1]
    %v321 = vlaneseq
    %v322 = vshrl.u32 %v321, 7
    %v323 = vsub.s32 0, %v322
    %v324 = vrot.slane %v320, %v323
    %325 = vmatprep.subr.mxu0 0.0
    %326 = vmatpush1.msra.mxu0 %v304
    %327 = vmatprep.subr.mxu0 0.0
    %328 = vmatpush1.msra.mxu0 %v305
    %329 = vmatprep.subr.mxu0 0.0
    %330 = vmatpush1.msra.mxu0 %v306
    %331 = vmatprep.subr.mxu0 0.0
    %332 = vmatpush1.msra.mxu0 %v307
    %333 = vmatprep.subr.mxu0 0.0
    %334 = vmatpush1.msra.mxu0 %v308
    %335 = vmatprep.subr.mxu0 0.0
    %336 = vmatpush1.msra.mxu0 %v309
    %337 = vmatprep.subr.mxu0 0.0
    %338 = vmatpush1.msra.mxu0 %v310
    %339 = vmatprep.subr.mxu0 0.0
    %340 = vmatpush1.msra.mxu0 %v311
    %341 = vmatprep.subr.mxu0 0.0
    %342 = vmatpush1.msra.mxu0 %v312
    %343 = vmatprep.subr.mxu0 0.0
    %344 = vmatpush1.msra.mxu0 %v313
    %345 = vmatprep.subr.mxu0 0.0
    %346 = vmatpush1.msra.mxu0 %v314
    %347 = vmatprep.subr.mxu0 0.0
    %348 = vmatpush1.msra.mxu0 %v315
    %349 = vmatprep.subr.mxu0 0.0
    %350 = vmatpush1.msra.mxu0 %v316
    %351 = vmatprep.subr.mxu0 0.0
    %352 = vmatpush1.msra.mxu0 %v317
    %353 = vmatprep.subr.mxu0 0.0
    %354 = vmatpush1.msra.mxu0 %v318
    %355 = vmatprep.subr.mxu0 0.0
    %356 = vmatpush1.msra.mxu0 %v319
    %357 = vmatprep.subr.mxu0 0.0
    %358 = vmatpush1.msra.mxu0 0.0
    %359 = vmatprep.subr.mxu0 0.0
    %360 = vmatpush1.msra.mxu0 0.0
    %361 = vmatprep.subr.mxu0 0.0
    %362 = vmatpush1.msra.mxu0 0.0
    %363 = vmatprep.subr.mxu0 0.0
    %364 = vmatpush1.msra.mxu0 0.0
    %365 = vmatprep.subr.mxu0 0.0
    %366 = vmatpush1.msra.mxu0 0.0
    %367 = vmatprep.subr.mxu0 0.0
    %368 = vmatpush1.msra.mxu0 0.0
    %369 = vmatprep.subr.mxu0 0.0
    %370 = vmatpush1.msra.mxu0 0.0
    %371 = vmatprep.subr.mxu0 0.0
    %372 = vmatpush1.msra.mxu0 0.0
    %373 = vmatprep.subr.mxu0 0.0
    %374 = vmatpush1.msra.mxu0 0.0
    %375 = vmatprep.subr.mxu0 0.0
    %376 = vmatpush1.msra.mxu0 0.0
    %377 = vmatprep.subr.mxu0 0.0
    %378 = vmatpush1.msra.mxu0 0.0
    %379 = vmatprep.subr.mxu0 0.0
    %380 = vmatpush1.msra.mxu0 0.0
    %381 = vmatprep.subr.mxu0 0.0
    %382 = vmatpush1.msra.mxu0 0.0
    %383 = vmatprep.subr.mxu0 0.0
    %384 = vmatpush1.msra.mxu0 0.0
    %385 = vmatprep.subr.mxu0 0.0
    %386 = vmatpush1.msra.mxu0 0.0
    %387 = vmatprep.subr.mxu0 0.0
    %388 = vmatpush1.msra.mxu0 0.0
    %389 = vmatprep.mubr.f32.mxu0 0.0
    %390 = vmatmul.mubr.f32.gmra.mrb[0].mxu0 %v302
    %v391 = vpop.f32.mrb[0].mxu0
    %v392 = vadd.f32 %v324, %v391
    %v393 = vpop.f32.mrb[0].mxu0
    %394 = vdwg.mxu0
    %v395 = vtanh.pop %v392
    %s396 = scalar_lea.vmem [#allocation2], 256
    %v397 = vld [vmem:[%s396] sm:$0xff]
    %v398 = vld [vmem:[%s396 + $0x8] sm:$0xff]
    %v399 = vld [vmem:[%s396 + $0x10] sm:$0xff]
    %v400 = vld [vmem:[%s396 + $0x18] sm:$0xff]
    %v401 = vld [vmem:[%s396 + $0x20] sm:$0xff]
    %v402 = vld [vmem:[%s396 + $0x28] sm:$0xff]
    %v403 = vld [vmem:[%s396 + $0x30] sm:$0xff]
    %v404 = vld [vmem:[%s396 + $0x38] sm:$0xff]
    %v405 = vld [vmem:[%s396 + $0x40] sm:$0xff]
    %v406 = vld [vmem:[%s396 + $0x48] sm:$0xff]
    %v407 = vld [vmem:[%s396 + $0x50] sm:$0xff]
    %v408 = vld [vmem:[%s396 + $0x58] sm:$0xff]
    %v409 = vld [vmem:[%s396 + $0x60] sm:$0xff]
    %v410 = vld [vmem:[%s396 + $0x68] sm:$0xff]
    %v411 = vld [vmem:[%s396 + $0x70] sm:$0xff]
    %v412 = vld [vmem:[%s396 + $0x78] sm:$0xff]
    %v413 = vld [vmem:[%s5 + $0x2] sm:$0x1]
    %v414 = vlaneseq
    %v415 = vshrl.u32 %v414, 7
    %v416 = vsub.s32 0, %v415
    %v417 = vrot.slane %v413, %v416
    %418 = vmatprep.subr.mxu0 0.0
    %419 = vmatpush1.msra.mxu0 %v397
    %420 = vmatprep.subr.mxu0 0.0
    %421 = vmatpush1.msra.mxu0 %v398
    %422 = vmatprep.subr.mxu0 0.0
    %423 = vmatpush1.msra.mxu0 %v399
    %424 = vmatprep.subr.mxu0 0.0
    %425 = vmatpush1.msra.mxu0 %v400
    %426 = vmatprep.subr.mxu0 0.0
    %427 = vmatpush1.msra.mxu0 %v401
    %428 = vmatprep.subr.mxu0 0.0
    %429 = vmatpush1.msra.mxu0 %v402
    %430 = vmatprep.subr.mxu0 0.0
    %431 = vmatpush1.msra.mxu0 %v403
    %432 = vmatprep.subr.mxu0 0.0
    %433 = vmatpush1.msra.mxu0 %v404
    %434 = vmatprep.subr.mxu0 0.0
    %435 = vmatpush1.msra.mxu0 %v405
    %436 = vmatprep.subr.mxu0 0.0
    %437 = vmatpush1.msra.mxu0 %v406
    %438 = vmatprep.subr.mxu0 0.0
    %439 = vmatpush1.msra.mxu0 %v407
    %440 = vmatprep.subr.mxu0 0.0
    %441 = vmatpush1.msra.mxu0 %v408
    %442 = vmatprep.subr.mxu0 0.0
    %443 = vmatpush1.msra.mxu0 %v409
    %444 = vmatprep.subr.mxu0 0.0
    %445 = vmatpush1.msra.mxu0 %v410
    %446 = vmatprep.subr.mxu0 0.0
    %447 = vmatpush1.msra.mxu0 %v411
    %448 = vmatprep.subr.mxu0 0.0
    %449 = vmatpush1.msra.mxu0 %v412
    %450 = vmatprep.subr.mxu0 0.0
    %451 = vmatpush1.msra.mxu0 0.0
    %452 = vmatprep.subr.mxu0 0.0
    %453 = vmatpush1.msra.mxu0 0.0
    %454 = vmatprep.subr.mxu0 0.0
    %455 = vmatpush1.msra.mxu0 0.0
    %456 = vmatprep.subr.mxu0 0.0
    %457 = vmatpush1.msra.mxu0 0.0
    %458 = vmatprep.subr.mxu0 0.0
    %459 = vmatpush1.msra.mxu0 0.0
    %460 = vmatprep.subr.mxu0 0.0
    %461 = vmatpush1.msra.mxu0 0.0
    %462 = vmatprep.subr.mxu0 0.0
    %463 = vmatpush1.msra.mxu0 0.0
    %464 = vmatprep.subr.mxu0 0.0
    %465 = vmatpush1.msra.mxu0 0.0
    %466 = vmatprep.subr.mxu0 0.0
    %467 = vmatpush1.msra.mxu0 0.0
    %468 = vmatprep.subr.mxu0 0.0
    %469 = vmatpush1.msra.mxu0 0.0
    %470 = vmatprep.subr.mxu0 0.0
    %471 = vmatpush1.msra.mxu0 0.0
    %472 = vmatprep.subr.mxu0 0.0
    %473 = vmatpush1.msra.mxu0 0.0
    %474 = vmatprep.subr.mxu0 0.0
    %475 = vmatpush1.msra.mxu0 0.0
    %476 = vmatprep.subr.mxu0 0.0
    %477 = vmatpush1.msra.mxu0 0.0
    %478 = vmatprep.subr.mxu0 0.0
    %479 = vmatpush1.msra.mxu0 0.0
    %480 = vmatprep.subr.mxu0 0.0
    %481 = vmatpush1.msra.mxu0 0.0
    %482 = vmatprep.mubr.f32.mxu0 0.0
    %483 = vmatmul.mubr.f32.gmra.mrb[0].mxu0 %v395
    %v484 = vpop.f32.mrb[0].mxu0
    %v485 = vadd.f32 %v417, %v484
    %v486 = vpop.f32.mrb[0].mxu0
    %487 = vdwg.mxu0
    %v488 = vmax.f32 %v485, 0.0
    %s489 = scalar_lea.vmem [#allocation2], 384
    %v490 = vld [vmem:[%s489] sm:$0xff]
    %v491 = vld [vmem:[%s489 + $0x8] sm:$0xff]
    %v492 = vld [vmem:[%s489 + $0x10] sm:$0xff]
    %v493 = vld [vmem:[%s489 + $0x18] sm:$0xff]
    %v494 = vld [vmem:[%s489 + $0x20] sm:$0xff]
    %v495 = vld [vmem:[%s489 + $0x28] sm:$0xff]
    %v496 = vld [vmem:[%s489 + $0x30] sm:$0xff]
    %v497 = vld [vmem:[%s489 + $0x38] sm:$0xff]
    %v498 = vld [vmem:[%s489 + $0x40] sm:$0xff]
    %v499 = vld [vmem:[%s489 + $0x48] sm:$0xff]
    %v500 = vld [vmem:[%s489 + $0x50] sm:$0xff]
    %v501 = vld [vmem:[%s489 + $0x58] sm:$0xff]
    %v502 = vld [vmem:[%s489 + $0x60] sm:$0xff]
    %v503 = vld [vmem:[%s489 + $0x68] sm:$0xff]
    %v504 = vld [vmem:[%s489 + $0x70] sm:$0xff]
    %v505 = vld [vmem:[%s489 + $0x78] sm:$0xff]
    %v506 = vld [vmem:[%s5 + $0x3] sm:$0x1]
    %v507 = vlaneseq
    %v508 = vshrl.u32 %v507, 7
    %v509 = vsub.s32 0, %v508
    %v510 = vrot.slane %v506, %v509
    %511 = vmatprep.subr.mxu0 0.0
    %512 = vmatpush1.msra.mxu0 %v490
    %513 = vmatprep.subr.mxu0 0.0
    %514 = vmatpush1.msra.mxu0 %v491
    %515 = vmatprep.subr.mxu0 0.0
    %516 = vmatpush1.msra.mxu0 %v492
    %517 = vmatprep.subr.mxu0 0.0
    %518 = vmatpush1.msra.mxu0 %v493
    %519 = vmatprep.subr.mxu0 0.0
    %520 = vmatpush1.msra.mxu0 %v494
    %521 = vmatprep.subr.mxu0 0.0
    %522 = vmatpush1.msra.mxu0 %v495
    %523 = vmatprep.subr.mxu0 0.0
    %524 = vmatpush1.msra.mxu0 %v496
    %525 = vmatprep.subr.mxu0 0.0
    %526 = vmatpush1.msra.mxu0 %v497
    %527 = vmatprep.subr.mxu0 0.0
    %528 = vmatpush1.msra.mxu0 %v498
    %529 = vmatprep.subr.mxu0 0.0
    %530 = vmatpush1.msra.mxu0 %v499
    %531 = vmatprep.subr.mxu0 0.0
    %532 = vmatpush1.msra.mxu0 %v500
    %533 = vmatprep.subr.mxu0 0.0
    %534 = vmatpush1.msra.mxu0 %v501
    %535 = vmatprep.subr.mxu0 0.0
    %536 = vmatpush1.msra.mxu0 %v502
    %537 = vmatprep.subr.mxu0 0.0
    %538 = vmatpush1.msra.mxu0 %v503
    %539 = vmatprep.subr.mxu0 0.0
    %540 = vmatpush1.msra.mxu0 %v504
    %541 = vmatprep.subr.mxu0 0.0
    %542 = vmatpush1.msra.mxu0 %v505
    %543 = vmatprep.subr.mxu0 0.0
    %544 = vmatpush1.msra.mxu0 0.0
    %545 = vmatprep.subr.mxu0 0.0
    %546 = vmatpush1.msra.mxu0 0.0
    %547 = vmatprep.subr.mxu0 0.0
    %548 = vmatpush1.msra.mxu0 0.0
    %549 = vmatprep.subr.mxu0 0.0
    %550 = vmatpush1.msra.mxu0 0.0
    %551 = vmatprep.subr.mxu0 0.0
    %552 = vmatpush1.msra.mxu0 0.0
    %553 = vmatprep.subr.mxu0 0.0
    %554 = vmatpush1.msra.mxu0 0.0
    %555 = vmatprep.subr.mxu0 0.0
    %556 = vmatpush1.msra.mxu0 0.0
    %557 = vmatprep.subr.mxu0 0.0
    %558 = vmatpush1.msra.mxu0 0.0
    %559 = vmatprep.subr.mxu0 0.0
    %560 = vmatpush1.msra.mxu0 0.0
    %561 = vmatprep.subr.mxu0 0.0
    %562 = vmatpush1.msra.mxu0 0.0
    %563 = vmatprep.subr.mxu0 0.0
    %564 = vmatpush1.msra.mxu0 0.0
    %565 = vmatprep.subr.mxu0 0.0
    %566 = vmatpush1.msra.mxu0 0.0
    %567 = vmatprep.subr.mxu0 0.0
    %568 = vmatpush1.msra.mxu0 0.0
    %569 = vmatprep.subr.mxu0 0.0
    %570 = vmatpush1.msra.mxu0 0.0
    %571 = vmatprep.subr.mxu0 0.0
    %572 = vmatpush1.msra.mxu0 0.0
    %573 = vmatprep.subr.mxu0 0.0
    %574 = vmatpush1.msra.mxu0 0.0
    %575 = vmatprep.mubr.f32.mxu0 0.0
    %576 = vmatmul.mubr.f32.gmra.mrb[0].mxu0 %v488
    %v577 = vpop.f32.mrb[0].mxu0
    %v578 = vadd.f32 %v510, %v577
    %v579 = vpop.f32.mrb[0].mxu0
    %580 = vdwg.mxu0
    %581 = vst [vmem:[#allocation5] sm:$0x3] %v578
    // Predicated region
    $region30: #{tpu_custom_call.1} parent=1 // pred_check
      _
    $region31: #{tpu_custom_call.1} parent=1 // pred_check_branch
      %583 = sbr.rel (0) target = $region33
    $region32: #{tpu_custom_call.1} parent=1 // pred_region
      %s585 = ssub.s32 32, 32
      %586 = vsyncadd [#allocation4], %s585
      %s588 = sshll.u32 [#allocation5], 4
      %s589 = int_to_ptr.vmem [resolvable:$true] %s588
      %591 = dma.vmem_to_hbm [thread:$0]  %s589, 32, %s6, [#allocation4]
    $region33: #{tpu_custom_call.1} parent=1 // pred_fallthru
      _
    // Predicated region
    $region34: #{tpu_custom_call.1} parent=1 // pred_check
      _
    $region35: #{tpu_custom_call.1} parent=1 // pred_check_branch
      %593 = sbr.rel (0) target = $region37
    $region36: #{tpu_custom_call.1} parent=1 // pred_region
      %594 = dma.done [#allocation4], 32
    $region37: #{tpu_custom_call.1} parent=1 // pred_fallthru
      _
    %595 = vsyncpa [#allocation3], 1
    %596 = vsyncpa [#allocation4], 1

</llo_original>
